<compile_context>
chip_gen: v7x
topology: tpu7x:2x2x1
jax: 0.10.0
libtpu: 0.0.40
codegen_flags: <defaults>
</compile_context>

<pallas_src>
import functools

import jax
import jax.numpy as jnp
from jax.experimental import pallas as pl
from jax.experimental.pallas import tpu as pltpu

_LANE = 128     # vreg lane width (last dim)
_SUBLANE = 8    # f32 sublane count (second-last dim)


def _round_up(x, m):
    return ((x + m - 1) // m) * m


def _decoder_kernel(z_ref, w1_ref, b1_ref, w2_ref, b2_ref, w3_ref, b3_ref,
                    y_ref, *, approx_silu):
    def silu(h):
        if approx_silu:
            # EUP-minimal form: one exp + one approx-recip per element.
            return h * pl.reciprocal(1.0 + jnp.exp(-h), approx=True)
        return h * jax.nn.sigmoid(h)

    # fc1 + SiLU  (MXU matmul in the weight dtype; accumulate + element-wise in f32)
    h = jnp.dot(z_ref[...], w1_ref[...], preferred_element_type=jnp.float32)
    h = silu(h + b1_ref[...])

    # fc2 + SiLU
    h = jnp.dot(h.astype(w2_ref.dtype), w2_ref[...],
                preferred_element_type=jnp.float32)
    h = silu(h + b2_ref[...])

    # fc3 + softplus (single-branch stable form: one exp + one log1p per element)
    o = jnp.dot(h.astype(w3_ref.dtype), w3_ref[...],
                preferred_element_type=jnp.float32)
    o = o + b3_ref[...]
    y = jnp.maximum(o, 0.0) + jnp.log1p(jnp.exp(-jnp.abs(o)))
    y_ref[...] = y.astype(y_ref.dtype)


def _pad2(a, rows, cols, dtype):
    a = a.astype(jnp.float32)
    a = jnp.pad(a, ((0, rows - a.shape[0]), (0, cols - a.shape[1])))
    return a.astype(dtype)


def prepare_decoder_params(params, *, matmul_dtype=jnp.bfloat16):
    """One-time zero-padding + cast of the decoder weights (call OUTSIDE the hot path).

    params: dict with w1 [in,h1], b1 [1,h1], w2 [h1,h2], b2 [1,h2],
            w3 [h2,obs], b3 [1,obs]
    Weights are cast to `matmul_dtype` (MXU operands); biases stay f32.
    """
    input_dim, h1 = params["w1"].shape
    h2 = params["w2"].shape[1]
    obs_dim = params["w3"].shape[1]
    in_p = _round_up(input_dim, _LANE)
    h1_p = _round_up(h1, _LANE)
    h2_p = _round_up(h2, _LANE)
    obs_p = _round_up(obs_dim, _LANE)
    return {
        "w1": _pad2(params["w1"], in_p, h1_p, matmul_dtype),
        "b1": _pad2(params["b1"], 1, h1_p, jnp.float32),
        "w2": _pad2(params["w2"], h1_p, h2_p, matmul_dtype),
        "b2": _pad2(params["b2"], 1, h2_p, jnp.float32),
        "w3": _pad2(params["w3"], h2_p, obs_p, matmul_dtype),
        "b3": _pad2(params["b3"], 1, obs_p, jnp.float32),
    }


def _resident_spec(shape):
    """Full-extent, grid-invariant block; single-buffered to halve its VMEM footprint."""
    idx = lambda i: (0, 0)
    try:
        return pl.BlockSpec(shape, idx, pipeline_mode=pl.Buffered(1))
    except (TypeError, AttributeError):
        # Older jax without pipeline_mode support: fall back to default buffering.
        return pl.BlockSpec(shape, idx)


def decoder_forward(z, padded_params, *, obs_dim, tile_b=None,
                    approx_silu=False, return_padded=False):
    """Full Decoder forward as one batch-tiled Pallas kernel.

    z: [B, input_dim] float32
    padded_params: output of prepare_decoder_params (lane-padded, pre-cast).
    obs_dim: true (unpadded) output feature count (static under jit).
    returns: [B, obs_dim] float32 (or the padded [B_pad, obs_pad] slab if
             return_padded=True, letting downstream consumers fuse the slice).
    """
    B, input_dim = z.shape
    w1, b1 = padded_params["w1"], padded_params["b1"]
    w2, b2 = padded_params["w2"], padded_params["b2"]
    w3, b3 = padded_params["w3"], padded_params["b3"]
    in_p, h1_p = w1.shape
    h2_p = w2.shape[1]
    obs_p = w3.shape[1]
    matmul_dtype = w1.dtype

    # Batch tile: multiple of 8 sublanes; fat tiles (<=512 rows) for large B,
    # capped so the live f32 intermediate (tile_b x max_hidden) stays ~<=512 KiB.
    if tile_b is None:
        max_h = max(h1_p, h2_p)
        cap = max(_SUBLANE, ((512 * 1024) // (max_h * 4)) // _SUBLANE * _SUBLANE)
        tile_b = int(min(512, cap, _round_up(max(B, 1), _SUBLANE)))
    tile_b = max(_SUBLANE, _round_up(tile_b, _SUBLANE))
    b_p = _round_up(B, tile_b)

    # Only the activation is padded/cast per call (weights were pre-padded once).
    z_p = jnp.pad(z.astype(jnp.float32),
                  ((0, b_p - B), (0, in_p - input_dim))).astype(matmul_dtype)

    # Explicit scoped-VMEM limit (v5e default is only 16 MiB; v6e/v7x 32 MiB).
    w_itemsize = jnp.dtype(matmul_dtype).itemsize
    w_bytes = (in_p * h1_p + h1_p * h2_p + h2_p * obs_p) * w_itemsize
    io_bytes = 2 * tile_b * (in_p * w_itemsize + obs_p * 4)   # double-buffered z / y tiles
    act_bytes = tile_b * (h1_p + h2_p) * 4                    # live f32 intermediates
    est = w_bytes + io_bytes + act_bytes + (h1_p + h2_p + obs_p) * 4
    vmem_limit = int(min(128 * 1024 * 1024, max(32 * 1024 * 1024, 2 * est)))

    grid = (b_p // tile_b,)

    y_p = pl.pallas_call(
        functools.partial(_decoder_kernel, approx_silu=approx_silu),
        out_shape=jax.ShapeDtypeStruct((b_p, obs_p), jnp.float32),
        grid=grid,
        in_specs=[
            pl.BlockSpec((tile_b, in_p), lambda i: (i, 0)),
            _resident_spec(w1.shape), _resident_spec(b1.shape),
            _resident_spec(w2.shape), _resident_spec(b2.shape),
            _resident_spec(w3.shape), _resident_spec(b3.shape),
        ],
        out_specs=pl.BlockSpec((tile_b, obs_p), lambda i: (i, 0)),
        compiler_params=pltpu.CompilerParams(
            # Independent batch tiles: shards across v7x's 2 TCs, no-op on v5e/v6e.
            dimension_semantics=("parallel",),
            vmem_limit_bytes=vmem_limit,
        ),
    )(z_p, w1, b1, w2, b2, w3, b3)

    if return_padded:
        return y_p
    return y_p[:B, :obs_dim]


def init_params(key, input_dim, obs_dim, hidden_dim_1, hidden_dim_2):
    """Deterministic synthetic parameter init (same shapes as the nn.Module)."""
    ks = jax.random.split(key, 6)

    def lin(kw, kb, fan_in, fan_out):
        # uniform(-1/sqrt(fan_in), 1/sqrt(fan_in)), like torch.nn.Linear default
        bound = 1.0 / jnp.sqrt(float(fan_in))
        w = jax.random.uniform(kw, (fan_in, fan_out), jnp.float32, -bound, bound)
        b = jax.random.uniform(kb, (1, fan_out), jnp.float32, -bound, bound)
        return w, b

    w1, b1 = lin(ks[0], ks[1], input_dim, hidden_dim_1)
    w2, b2 = lin(ks[2], ks[3], hidden_dim_1, hidden_dim_2)
    w3, b3 = lin(ks[4], ks[5], hidden_dim_2, obs_dim)
    return dict(w1=w1, b1=b1, w2=w2, b2=b2, w3=w3, b3=b3)


def decoder_ref(z, p):
    """Pure-JAX reference (mirrors the PyTorch forward)."""
    h = jax.nn.silu(z @ p["w1"] + p["b1"])
    h = jax.nn.silu(h @ p["w2"] + p["b2"])
    return jax.nn.softplus(h @ p["w3"] + p["b3"])


if __name__ == "__main__":
    # Small shapes consistent with the module's forward.
    B, input_dim, hidden_dim_1, hidden_dim_2, obs_dim = 8, 16, 32, 64, 16

    key = jax.random.PRNGKey(0)
    k_z, k_p = jax.random.split(key)

    z = jax.random.normal(k_z, (B, input_dim), jnp.float32)
    params = init_params(k_p, input_dim, obs_dim, hidden_dim_1, hidden_dim_2)
    y_ref = decoder_ref(z, params)

    fwd = jax.jit(decoder_forward,
                  static_argnames=("obs_dim", "tile_b", "approx_silu", "return_padded"))

    # f32 MXU path: tight check vs the f32 reference.
    p_f32 = prepare_decoder_params(params, matmul_dtype=jnp.float32)
    y_f32 = jax.block_until_ready(fwd(z, p_f32, obs_dim=obs_dim))
    assert y_f32.shape == (B, obs_dim)
    assert jnp.allclose(y_f32, y_ref, atol=1e-5, rtol=1e-5), "f32 path mismatch vs reference"

    # bf16 MXU path (the perf default on v5e/v6e/v7x): relaxed tolerance.
    p_bf16 = prepare_decoder_params(params)  # matmul_dtype=bfloat16 default
    y_bf16 = jax.block_until_ready(fwd(z, p_bf16, obs_dim=obs_dim))
    assert y_bf16.shape == (B, obs_dim)
    assert jnp.allclose(y_bf16, y_ref, atol=5e-2, rtol=5e-2), "bf16 path mismatch vs reference"

    print("KERNEL_OK")
</pallas_src>

<mosaic_0001>
module attributes {stable_mosaic.version = 11 : i64} {
  func.func @_decoder_kernel(%arg0: i32, %arg1: memref<8x128xf32, #tpu.memory_space<vmem>>, %arg2: memref<128x128xf32, #tpu.memory_space<vmem>>, %arg3: memref<1x128xf32, #tpu.memory_space<vmem>>, %arg4: memref<128x128xf32, #tpu.memory_space<vmem>>, %arg5: memref<1x128xf32, #tpu.memory_space<vmem>>, %arg6: memref<128x128xf32, #tpu.memory_space<vmem>>, %arg7: memref<1x128xf32, #tpu.memory_space<vmem>>, %arg8: memref<8x128xf32, #tpu.memory_space<vmem>>) attributes {dimension_semantics = [#tpu.dimension_semantics<parallel>], iteration_bounds = array<i64: 1>, scalar_prefetch = 0 : i64, scratch_operands = 0 : i64, tpu.core_type = #tpu.core_type<tc>, window_params = [{transform_indices = @transform_0, window_bounds = array<i64: 8, 128>}, {pipeline_mode = #tpu.pipeline_mode<synchronous>, transform_indices = @transform_1, window_bounds = array<i64: 128, 128>}, {pipeline_mode = #tpu.pipeline_mode<synchronous>, transform_indices = @transform_2, window_bounds = array<i64: 1, 128>}, {pipeline_mode = #tpu.pipeline_mode<synchronous>, transform_indices = @transform_3, window_bounds = array<i64: 128, 128>}, {pipeline_mode = #tpu.pipeline_mode<synchronous>, transform_indices = @transform_4, window_bounds = array<i64: 1, 128>}, {pipeline_mode = #tpu.pipeline_mode<synchronous>, transform_indices = @transform_5, window_bounds = array<i64: 128, 128>}, {pipeline_mode = #tpu.pipeline_mode<synchronous>, transform_indices = @transform_6, window_bounds = array<i64: 1, 128>}, {transform_indices = @transform_7, window_bounds = array<i64: 8, 128>}]} {
    %c0 = arith.constant 0 : index
    %c0_0 = arith.constant 0 : index
    %0 = vector.load %arg1[%c0, %c0_0] : memref<8x128xf32, #tpu.memory_space<vmem>>, vector<8x128xf32>
    %c0_1 = arith.constant 0 : index
    %c0_2 = arith.constant 0 : index
    %1 = vector.load %arg2[%c0_1, %c0_2] : memref<128x128xf32, #tpu.memory_space<vmem>>, vector<128x128xf32>
    %cst = arith.constant dense<0.000000e+00> : vector<8x128xf32>
    %2 = tpu.matmul %0, %1, %cst {dimension_numbers = #tpu.dot_dimension_numbers<[1], [0], [0], [1], [0, 0, 1, 1], [], []>} : vector<8x128xf32>, vector<128x128xf32>, vector<8x128xf32> -> vector<8x128xf32>
    %c0_3 = arith.constant 0 : index
    %c0_4 = arith.constant 0 : index
    %3 = vector.load %arg3[%c0_3, %c0_4] : memref<1x128xf32, #tpu.memory_space<vmem>>, vector<1x128xf32>
    %4 = vector.broadcast %3 : vector<1x128xf32> to vector<8x128xf32>
    %5 = arith.addf %2, %4 : vector<8x128xf32>
    %6 = arith.negf %5 : vector<8x128xf32>
    %7 = math.exp %6 : vector<8x128xf32>
    %cst_5 = arith.constant 1.000000e+00 : f32
    %8 = vector.broadcast %cst_5 : f32 to vector<8x128xf32>
    %9 = arith.addf %8, %7 : vector<8x128xf32>
    %10 = arith.divf %8, %9 : vector<8x128xf32>
    %11 = arith.mulf %5, %10 : vector<8x128xf32>
    %c0_6 = arith.constant 0 : index
    %c0_7 = arith.constant 0 : index
    %12 = vector.load %arg4[%c0_6, %c0_7] : memref<128x128xf32, #tpu.memory_space<vmem>>, vector<128x128xf32>
    %cst_8 = arith.constant dense<0.000000e+00> : vector<8x128xf32>
    %13 = tpu.matmul %11, %12, %cst_8 {dimension_numbers = #tpu.dot_dimension_numbers<[1], [0], [0], [1], [0, 0, 1, 1], [], []>} : vector<8x128xf32>, vector<128x128xf32>, vector<8x128xf32> -> vector<8x128xf32>
    %c0_9 = arith.constant 0 : index
    %c0_10 = arith.constant 0 : index
    %14 = vector.load %arg5[%c0_9, %c0_10] : memref<1x128xf32, #tpu.memory_space<vmem>>, vector<1x128xf32>
    %15 = vector.broadcast %14 : vector<1x128xf32> to vector<8x128xf32>
    %16 = arith.addf %13, %15 : vector<8x128xf32>
    %17 = arith.negf %16 : vector<8x128xf32>
    %18 = math.exp %17 : vector<8x128xf32>
    %cst_11 = arith.constant 1.000000e+00 : f32
    %19 = vector.broadcast %cst_11 : f32 to vector<8x128xf32>
    %20 = arith.addf %19, %18 : vector<8x128xf32>
    %21 = arith.divf %19, %20 : vector<8x128xf32>
    %22 = arith.mulf %16, %21 : vector<8x128xf32>
    %c0_12 = arith.constant 0 : index
    %c0_13 = arith.constant 0 : index
    %23 = vector.load %arg6[%c0_12, %c0_13] : memref<128x128xf32, #tpu.memory_space<vmem>>, vector<128x128xf32>
    %cst_14 = arith.constant dense<0.000000e+00> : vector<8x128xf32>
    %24 = tpu.matmul %22, %23, %cst_14 {dimension_numbers = #tpu.dot_dimension_numbers<[1], [0], [0], [1], [0, 0, 1, 1], [], []>} : vector<8x128xf32>, vector<128x128xf32>, vector<8x128xf32> -> vector<8x128xf32>
    %c0_15 = arith.constant 0 : index
    %c0_16 = arith.constant 0 : index
    %25 = vector.load %arg7[%c0_15, %c0_16] : memref<1x128xf32, #tpu.memory_space<vmem>>, vector<1x128xf32>
    %26 = vector.broadcast %25 : vector<1x128xf32> to vector<8x128xf32>
    %27 = arith.addf %24, %26 : vector<8x128xf32>
    %cst_17 = arith.constant 0.000000e+00 : f32
    %28 = vector.broadcast %cst_17 : f32 to vector<8x128xf32>
    %29 = arith.maximumf %27, %28 : vector<8x128xf32>
    %30 = math.absf %27 : vector<8x128xf32>
    %cst_18 = arith.constant 0.000000e+00 : f32
    %31 = vector.broadcast %cst_18 : f32 to vector<8x128xf32>
    %32 = arith.subf %31, %30 : vector<8x128xf32>
    %33 = math.exp %32 : vector<8x128xf32>
    %34 = math.log1p %33 : vector<8x128xf32>
    %35 = arith.addf %29, %34 : vector<8x128xf32>
    %c0_19 = arith.constant 0 : index
    %c0_20 = arith.constant 0 : index
    %36 = vector.load %arg8[%c0_19, %c0_20] : memref<8x128xf32, #tpu.memory_space<vmem>>, vector<8x128xf32>
    tpu.vector_store %arg8[%c0_19, %c0_20], %35 {strides = array<i32>} : memref<8x128xf32, #tpu.memory_space<vmem>>, vector<8x128xf32>,
    return
  }
  func.func @transform_0(%arg0: i32) -> (i32, i32) {
    %c0_i32 = arith.constant 0 : i32
    %c0_i32_0 = arith.constant 0 : i32
    return %arg0, %c0_i32 : i32, i32
  }
  func.func @transform_1(%arg0: i32) -> (i32, i32) {
    %c0_i32 = arith.constant 0 : i32
    %c0_i32_0 = arith.constant 0 : i32
    %c0_i32_1 = arith.constant 0 : i32
    return %c0_i32, %c0_i32_0 : i32, i32
  }
  func.func @transform_2(%arg0: i32) -> (i32, i32) {
    %c0_i32 = arith.constant 0 : i32
    %c0_i32_0 = arith.constant 0 : i32
    %c0_i32_1 = arith.constant 0 : i32
    return %c0_i32, %c0_i32_0 : i32, i32
  }
  func.func @transform_3(%arg0: i32) -> (i32, i32) {
    %c0_i32 = arith.constant 0 : i32
    %c0_i32_0 = arith.constant 0 : i32
    %c0_i32_1 = arith.constant 0 : i32
    return %c0_i32, %c0_i32_0 : i32, i32
  }
  func.func @transform_4(%arg0: i32) -> (i32, i32) {
    %c0_i32 = arith.constant 0 : i32
    %c0_i32_0 = arith.constant 0 : i32
    %c0_i32_1 = arith.constant 0 : i32
    return %c0_i32, %c0_i32_0 : i32, i32
  }
  func.func @transform_5(%arg0: i32) -> (i32, i32) {
    %c0_i32 = arith.constant 0 : i32
    %c0_i32_0 = arith.constant 0 : i32
    %c0_i32_1 = arith.constant 0 : i32
    return %c0_i32, %c0_i32_0 : i32, i32
  }
  func.func @transform_6(%arg0: i32) -> (i32, i32) {
    %c0_i32 = arith.constant 0 : i32
    %c0_i32_0 = arith.constant 0 : i32
    %c0_i32_1 = arith.constant 0 : i32
    return %c0_i32, %c0_i32_0 : i32, i32
  }
  func.func @transform_7(%arg0: i32) -> (i32, i32) {
    %c0_i32 = arith.constant 0 : i32
    %c0_i32_0 = arith.constant 0 : i32
    return %arg0, %c0_i32 : i32, i32
  }
}

</mosaic_0001>

<llo_original>
// kernel: decoder_forward.1
$region0: #{decoder_forward.1}
  #allocation0 [shape = 'u32[]', space=smem, size = 0x4, offset = 0x4, fixed_abs, tag = 'smem constant byte address 0x4 - core index']
  #allocation1 [shape = 'u32[144,128]{1,0:T(1,128)}', space=vmem, size = 0x12000, scoped, tag = 'internal scratch']
  %s0 = inlined_call_operand.vmem [shape: f32[8,128], index: 0, kind: input, shape index: {}]
  %s1 = inlined_call_operand.hbm [shape: f32[128,128], index: 1, kind: input, shape index: {}]
  %s2 = inlined_call_operand.vmem [shape: f32[1,128], index: 2, kind: input, shape index: {}]
  %s3 = inlined_call_operand.hbm [shape: f32[128,128], index: 3, kind: input, shape index: {}]
  %s4 = inlined_call_operand.vmem [shape: f32[1,128], index: 4, kind: input, shape index: {}]
  %s5 = inlined_call_operand.hbm [shape: f32[128,128], index: 5, kind: input, shape index: {}]
  %s6 = inlined_call_operand.vmem [shape: f32[1,128], index: 6, kind: input, shape index: {}]
  %s7 = inlined_call_operand.hbm [shape: f32[8,128], index: 7, kind: output, shape index: {}]
  %s8 = sld [smem:[#allocation0]]
  $region50: #{decoder_forward.1} parent=0
    _
  %s10 = ssub.s32 1, %s8
  %s11 = scalar_select 0, %s10, %s8
  $region1: #{decoder_forward.1} parent=0
    #allocation2 [shape = 'u8[65536]{0}', space=vmem, size = 0x10000, scoped, tag = 'input window, operand 1, single buffered']
    #allocation3 [shape = 's32[1]{0}', space=sflag, size = 0x4, scoped, tag = 'scoped memory for decoder_forward.1']
    #allocation4 [shape = 's32[1]{0}', space=sflag, size = 0x4, scoped, tag = 'scoped memory for decoder_forward.1']
    #allocation5 [shape = 'u8[65536]{0}', space=vmem, size = 0x10000, scoped, tag = 'input window, operand 3, single buffered']
    #allocation6 [shape = 's32[1]{0}', space=sflag, size = 0x4, scoped, tag = 'scoped memory for decoder_forward.1']
    #allocation7 [shape = 'u8[65536]{0}', space=vmem, size = 0x10000, scoped, tag = 'input window, operand 5, single buffered']
    #allocation8 [shape = 'u8[4096]{0}', space=vmem, size = 0x1000, scoped, tag = 'output window, operand 0, single buffered']
    %12 = vsyncpa [#allocation3], 0
    %13 = vsyncpa [#allocation6], 0
    %14 = vsyncpa [#allocation4], 0
    // Predicated region
    $region2: #{decoder_forward.1} parent=1 // pred_check
      _
    $region3: #{decoder_forward.1} parent=1 // pred_check_branch
      %16 = sbr.rel (0) target = $region5
    $region4: #{decoder_forward.1} parent=1 // pred_region
      _
    $region5: #{decoder_forward.1} parent=1 // pred_fallthru
      _
    // Predicated region
    $region6: #{decoder_forward.1} parent=1 // pred_check
      _
    $region7: #{decoder_forward.1} parent=1 // pred_check_branch
      %18 = sbr.rel (0) target = $region9
    $region8: #{decoder_forward.1} parent=1 // pred_region
      %s20 = ssub.s32 2048, 2048
      %21 = vsyncadd [#allocation3], %s20
      %s22 = sshll.u32 [#allocation2], 4
      %s23 = int_to_ptr.vmem [resolvable:$true] %s22
      %28 = dma.hbm_to_vmem [thread:$0]  %s1, 2048, %s23, [#allocation3], 128, 128, 8
    $region9: #{decoder_forward.1} parent=1 // pred_fallthru
      _
    // Predicated region
    $region10: #{decoder_forward.1} parent=1 // pred_check
      _
    $region11: #{decoder_forward.1} parent=1 // pred_check_branch
      %30 = sbr.rel (0) target = $region13
    $region12: #{decoder_forward.1} parent=1 // pred_region
      _
    $region13: #{decoder_forward.1} parent=1 // pred_fallthru
      _
    // Predicated region
    $region14: #{decoder_forward.1} parent=1 // pred_check
      _
    $region15: #{decoder_forward.1} parent=1 // pred_check_branch
      %32 = sbr.rel (0) target = $region17
    $region16: #{decoder_forward.1} parent=1 // pred_region
      %s34 = ssub.s32 2048, 2048
      %35 = vsyncadd [#allocation6], %s34
      %s36 = sshll.u32 [#allocation5], 4
      %s37 = int_to_ptr.vmem [resolvable:$true] %s36
      %42 = dma.hbm_to_vmem [thread:$0]  %s3, 2048, %s37, [#allocation6], 128, 128, 8
    $region17: #{decoder_forward.1} parent=1 // pred_fallthru
      _
    // Predicated region
    $region18: #{decoder_forward.1} parent=1 // pred_check
      _
    $region19: #{decoder_forward.1} parent=1 // pred_check_branch
      %44 = sbr.rel (0) target = $region21
    $region20: #{decoder_forward.1} parent=1 // pred_region
      _
    $region21: #{decoder_forward.1} parent=1 // pred_fallthru
      _
    // Predicated region
    $region22: #{decoder_forward.1} parent=1 // pred_check
      _
    $region23: #{decoder_forward.1} parent=1 // pred_check_branch
      %46 = sbr.rel (0) target = $region25
    $region24: #{decoder_forward.1} parent=1 // pred_region
      %s48 = ssub.s32 2048, 2048
      %49 = vsyncadd [#allocation6], %s48
      %s50 = sshll.u32 [#allocation7], 4
      %s51 = int_to_ptr.vmem [resolvable:$true] %s50
      %56 = dma.hbm_to_vmem [thread:$0]  %s5, 2048, %s51, [#allocation6], 128, 128, 8
    $region25: #{decoder_forward.1} parent=1 // pred_fallthru
      _
    // Predicated region
    $region26: #{decoder_forward.1} parent=1 // pred_check
      _
    $region27: #{decoder_forward.1} parent=1 // pred_check_branch
      %58 = sbr.rel (0) target = $region29
    $region28: #{decoder_forward.1} parent=1 // pred_region
      _
    $region29: #{decoder_forward.1} parent=1 // pred_fallthru
      _
    // Predicated region
    $region30: #{decoder_forward.1} parent=1 // pred_check
      _
    $region31: #{decoder_forward.1} parent=1 // pred_check_branch
      %60 = sbr.rel (0) target = $region33
    $region32: #{decoder_forward.1} parent=1 // pred_region
      %61 = dma.done [#allocation3], 2048
    $region33: #{decoder_forward.1} parent=1 // pred_fallthru
      _
    // Predicated region
    $region34: #{decoder_forward.1} parent=1 // pred_check
      _
    $region35: #{decoder_forward.1} parent=1 // pred_check_branch
      %63 = sbr.rel (0) target = $region37
    $region36: #{decoder_forward.1} parent=1 // pred_region
      %64 = dma.done [#allocation6], 2048
    $region37: #{decoder_forward.1} parent=1 // pred_fallthru
      _
    // Predicated region
    $region38: #{decoder_forward.1} parent=1 // pred_check
      _
    $region39: #{decoder_forward.1} parent=1 // pred_check_branch
      %66 = sbr.rel (0) target = $region41
    $region40: #{decoder_forward.1} parent=1 // pred_region
      %67 = dma.done [#allocation6], 2048
    $region41: #{decoder_forward.1} parent=1 // pred_fallthru
      _
    %v68 = vld [vmem:[%s0] sm:$0xff]
    %v69 = vld [vmem:[#allocation2] sm:$0xff]
    %v70 = vld [vmem:[#allocation2 + $0x8] sm:$0xff]
    %v71 = vld [vmem:[#allocation2 + $0x10] sm:$0xff]
    %v72 = vld [vmem:[#allocation2 + $0x18] sm:$0xff]
    %v73 = vld [vmem:[#allocation2 + $0x20] sm:$0xff]
    %v74 = vld [vmem:[#allocation2 + $0x28] sm:$0xff]
    %v75 = vld [vmem:[#allocation2 + $0x30] sm:$0xff]
    %v76 = vld [vmem:[#allocation2 + $0x38] sm:$0xff]
    %v77 = vld [vmem:[#allocation2 + $0x40] sm:$0xff]
    %v78 = vld [vmem:[#allocation2 + $0x48] sm:$0xff]
    %v79 = vld [vmem:[#allocation2 + $0x50] sm:$0xff]
    %v80 = vld [vmem:[#allocation2 + $0x58] sm:$0xff]
    %v81 = vld [vmem:[#allocation2 + $0x60] sm:$0xff]
    %v82 = vld [vmem:[#allocation2 + $0x68] sm:$0xff]
    %v83 = vld [vmem:[#allocation2 + $0x70] sm:$0xff]
    %v84 = vld [vmem:[#allocation2 + $0x78] sm:$0xff]
    %v85 = vld [vmem:[%s2] sm:$0x1]
    %v87 = vlaneseq
    %v88 = vshrl.u32 %v87, 7
    %v89 = vsub.s32 0, %v88
    %v90 = vrot.slane %v85, %v89
    %92 = vmatprep.subr.mxu0 0.0
    %93 = vmatpush1.msra.mxu0 %v69
    %94 = vmatprep.subr.mxu0 0.0
    %95 = vmatpush1.msra.mxu0 %v70
    %96 = vmatprep.subr.mxu0 0.0
    %97 = vmatpush1.msra.mxu0 %v71
    %98 = vmatprep.subr.mxu0 0.0
    %99 = vmatpush1.msra.mxu0 %v72
    %100 = vmatprep.subr.mxu0 0.0
    %101 = vmatpush1.msra.mxu0 %v73
    %102 = vmatprep.subr.mxu0 0.0
    %103 = vmatpush1.msra.mxu0 %v74
    %104 = vmatprep.subr.mxu0 0.0
    %105 = vmatpush1.msra.mxu0 %v75
    %106 = vmatprep.subr.mxu0 0.0
    %107 = vmatpush1.msra.mxu0 %v76
    %108 = vmatprep.subr.mxu0 0.0
    %109 = vmatpush1.msra.mxu0 %v77
    %110 = vmatprep.subr.mxu0 0.0
    %111 = vmatpush1.msra.mxu0 %v78
    %112 = vmatprep.subr.mxu0 0.0
    %113 = vmatpush1.msra.mxu0 %v79
    %114 = vmatprep.subr.mxu0 0.0
    %115 = vmatpush1.msra.mxu0 %v80
    %116 = vmatprep.subr.mxu0 0.0
    %117 = vmatpush1.msra.mxu0 %v81
    %118 = vmatprep.subr.mxu0 0.0
    %119 = vmatpush1.msra.mxu0 %v82
    %120 = vmatprep.subr.mxu0 0.0
    %121 = vmatpush1.msra.mxu0 %v83
    %122 = vmatprep.subr.mxu0 0.0
    %123 = vmatpush1.msra.mxu0 %v84
    %124 = vmatprep.subr.mxu0 0.0
    %125 = vmatpush1.msra.mxu0 0.0
    %126 = vmatprep.subr.mxu0 0.0
    %127 = vmatpush1.msra.mxu0 0.0
    %128 = vmatprep.subr.mxu0 0.0
    %129 = vmatpush1.msra.mxu0 0.0
    %130 = vmatprep.subr.mxu0 0.0
    %131 = vmatpush1.msra.mxu0 0.0
    %132 = vmatprep.subr.mxu0 0.0
    %133 = vmatpush1.msra.mxu0 0.0
    %134 = vmatprep.subr.mxu0 0.0
    %135 = vmatpush1.msra.mxu0 0.0
    %136 = vmatprep.subr.mxu0 0.0
    %137 = vmatpush1.msra.mxu0 0.0
    %138 = vmatprep.subr.mxu0 0.0
    %139 = vmatpush1.msra.mxu0 0.0
    %140 = vmatprep.subr.mxu0 0.0
    %141 = vmatpush1.msra.mxu0 0.0
    %142 = vmatprep.subr.mxu0 0.0
    %143 = vmatpush1.msra.mxu0 0.0
    %144 = vmatprep.subr.mxu0 0.0
    %145 = vmatpush1.msra.mxu0 0.0
    %146 = vmatprep.subr.mxu0 0.0
    %147 = vmatpush1.msra.mxu0 0.0
    %148 = vmatprep.subr.mxu0 0.0
    %149 = vmatpush1.msra.mxu0 0.0
    %150 = vmatprep.subr.mxu0 0.0
    %151 = vmatpush1.msra.mxu0 0.0
    %152 = vmatprep.subr.mxu0 0.0
    %153 = vmatpush1.msra.mxu0 0.0
    %154 = vmatprep.subr.mxu0 0.0
    %155 = vmatpush1.msra.mxu0 0.0
    %156 = vmatprep.mubr.f32.mxu0 0.0
    %157 = vmatmul.mubr.f32.gmra.mrb[0].mxu0 %v68
    %v158 = vpop.f32.mrb[0].mxu0
    %v159 = vadd.f32 %v90, %v158
    %v160 = vpop.f32.mrb[0].mxu0
    %161 = vdwg.mxu0
    %v162 = vxor.u32 %v159, 2147483648
    %v163 = vmul.f32 %v162, 1.442695
    %v164 = vpow.pop %v163
    %v165 = vadd.f32 %v164, 1.0
    %v166 = vrcp.pop %v165
    %v167 = vmul.f32 1.0, %v166
    %v168 = vmul.f32 %v159, %v167
    %v169 = vld [vmem:[#allocation5] sm:$0xff]
    %v170 = vld [vmem:[#allocation5 + $0x8] sm:$0xff]
    %v171 = vld [vmem:[#allocation5 + $0x10] sm:$0xff]
    %v172 = vld [vmem:[#allocation5 + $0x18] sm:$0xff]
    %v173 = vld [vmem:[#allocation5 + $0x20] sm:$0xff]
    %v174 = vld [vmem:[#allocation5 + $0x28] sm:$0xff]
    %v175 = vld [vmem:[#allocation5 + $0x30] sm:$0xff]
    %v176 = vld [vmem:[#allocation5 + $0x38] sm:$0xff]
    %v177 = vld [vmem:[#allocation5 + $0x40] sm:$0xff]
    %v178 = vld [vmem:[#allocation5 + $0x48] sm:$0xff]
    %v179 = vld [vmem:[#allocation5 + $0x50] sm:$0xff]
    %v180 = vld [vmem:[#allocation5 + $0x58] sm:$0xff]
    %v181 = vld [vmem:[#allocation5 + $0x60] sm:$0xff]
    %v182 = vld [vmem:[#allocation5 + $0x68] sm:$0xff]
    %v183 = vld [vmem:[#allocation5 + $0x70] sm:$0xff]
    %v184 = vld [vmem:[#allocation5 + $0x78] sm:$0xff]
    %v185 = vld [vmem:[%s4] sm:$0x1]
    %v187 = vlaneseq
    %v188 = vshrl.u32 %v187, 7
    %v189 = vsub.s32 0, %v188
    %v190 = vrot.slane %v185, %v189
    %192 = vmatprep.subr.mxu0 0.0
    %193 = vmatpush1.msra.mxu0 %v169
    %194 = vmatprep.subr.mxu0 0.0
    %195 = vmatpush1.msra.mxu0 %v170
    %196 = vmatprep.subr.mxu0 0.0
    %197 = vmatpush1.msra.mxu0 %v171
    %198 = vmatprep.subr.mxu0 0.0
    %199 = vmatpush1.msra.mxu0 %v172
    %200 = vmatprep.subr.mxu0 0.0
    %201 = vmatpush1.msra.mxu0 %v173
    %202 = vmatprep.subr.mxu0 0.0
    %203 = vmatpush1.msra.mxu0 %v174
    %204 = vmatprep.subr.mxu0 0.0
    %205 = vmatpush1.msra.mxu0 %v175
    %206 = vmatprep.subr.mxu0 0.0
    %207 = vmatpush1.msra.mxu0 %v176
    %208 = vmatprep.subr.mxu0 0.0
    %209 = vmatpush1.msra.mxu0 %v177
    %210 = vmatprep.subr.mxu0 0.0
    %211 = vmatpush1.msra.mxu0 %v178
    %212 = vmatprep.subr.mxu0 0.0
    %213 = vmatpush1.msra.mxu0 %v179
    %214 = vmatprep.subr.mxu0 0.0
    %215 = vmatpush1.msra.mxu0 %v180
    %216 = vmatprep.subr.mxu0 0.0
    %217 = vmatpush1.msra.mxu0 %v181
    %218 = vmatprep.subr.mxu0 0.0
    %219 = vmatpush1.msra.mxu0 %v182
    %220 = vmatprep.subr.mxu0 0.0
    %221 = vmatpush1.msra.mxu0 %v183
    %222 = vmatprep.subr.mxu0 0.0
    %223 = vmatpush1.msra.mxu0 %v184
    %224 = vmatprep.subr.mxu0 0.0
    %225 = vmatpush1.msra.mxu0 0.0
    %226 = vmatprep.subr.mxu0 0.0
    %227 = vmatpush1.msra.mxu0 0.0
    %228 = vmatprep.subr.mxu0 0.0
    %229 = vmatpush1.msra.mxu0 0.0
    %230 = vmatprep.subr.mxu0 0.0
    %231 = vmatpush1.msra.mxu0 0.0
    %232 = vmatprep.subr.mxu0 0.0
    %233 = vmatpush1.msra.mxu0 0.0
    %234 = vmatprep.subr.mxu0 0.0
    %235 = vmatpush1.msra.mxu0 0.0
    %236 = vmatprep.subr.mxu0 0.0
    %237 = vmatpush1.msra.mxu0 0.0
    %238 = vmatprep.subr.mxu0 0.0
    %239 = vmatpush1.msra.mxu0 0.0
    %240 = vmatprep.subr.mxu0 0.0
    %241 = vmatpush1.msra.mxu0 0.0
    %242 = vmatprep.subr.mxu0 0.0
    %243 = vmatpush1.msra.mxu0 0.0
    %244 = vmatprep.subr.mxu0 0.0
    %245 = vmatpush1.msra.mxu0 0.0
    %246 = vmatprep.subr.mxu0 0.0
    %247 = vmatpush1.msra.mxu0 0.0
    %248 = vmatprep.subr.mxu0 0.0
    %249 = vmatpush1.msra.mxu0 0.0
    %250 = vmatprep.subr.mxu0 0.0
    %251 = vmatpush1.msra.mxu0 0.0
    %252 = vmatprep.subr.mxu0 0.0
    %253 = vmatpush1.msra.mxu0 0.0
    %254 = vmatprep.subr.mxu0 0.0
    %255 = vmatpush1.msra.mxu0 0.0
    %256 = vmatprep.mubr.f32.mxu0 0.0
    %257 = vmatmul.mubr.f32.gmra.mrb[0].mxu0 %v168
    %v258 = vpop.f32.mrb[0].mxu0
    %v259 = vadd.f32 %v190, %v258
    %v260 = vpop.f32.mrb[0].mxu0
    %261 = vdwg.mxu0
    %v262 = vxor.u32 %v259, 2147483648
    %v263 = vmul.f32 %v262, 1.442695
    %v264 = vpow.pop %v263
    %v265 = vadd.f32 %v264, 1.0
    %v266 = vrcp.pop %v265
    %v267 = vmul.f32 1.0, %v266
    %v268 = vmul.f32 %v259, %v267
    %v269 = vld [vmem:[#allocation7] sm:$0xff]
    %v270 = vld [vmem:[#allocation7 + $0x8] sm:$0xff]
    %v271 = vld [vmem:[#allocation7 + $0x10] sm:$0xff]
    %v272 = vld [vmem:[#allocation7 + $0x18] sm:$0xff]
    %v273 = vld [vmem:[#allocation7 + $0x20] sm:$0xff]
    %v274 = vld [vmem:[#allocation7 + $0x28] sm:$0xff]
    %v275 = vld [vmem:[#allocation7 + $0x30] sm:$0xff]
    %v276 = vld [vmem:[#allocation7 + $0x38] sm:$0xff]
    %v277 = vld [vmem:[#allocation7 + $0x40] sm:$0xff]
    %v278 = vld [vmem:[#allocation7 + $0x48] sm:$0xff]
    %v279 = vld [vmem:[#allocation7 + $0x50] sm:$0xff]
    %v280 = vld [vmem:[#allocation7 + $0x58] sm:$0xff]
    %v281 = vld [vmem:[#allocation7 + $0x60] sm:$0xff]
    %v282 = vld [vmem:[#allocation7 + $0x68] sm:$0xff]
    %v283 = vld [vmem:[#allocation7 + $0x70] sm:$0xff]
    %v284 = vld [vmem:[#allocation7 + $0x78] sm:$0xff]
    %v285 = vld [vmem:[%s6] sm:$0x1]
    %v287 = vlaneseq
    %v288 = vshrl.u32 %v287, 7
    %v289 = vsub.s32 0, %v288
    %v290 = vrot.slane %v285, %v289
    %292 = vmatprep.subr.mxu0 0.0
    %293 = vmatpush1.msra.mxu0 %v269
    %294 = vmatprep.subr.mxu0 0.0
    %295 = vmatpush1.msra.mxu0 %v270
    %296 = vmatprep.subr.mxu0 0.0
    %297 = vmatpush1.msra.mxu0 %v271
    %298 = vmatprep.subr.mxu0 0.0
    %299 = vmatpush1.msra.mxu0 %v272
    %300 = vmatprep.subr.mxu0 0.0
    %301 = vmatpush1.msra.mxu0 %v273
    %302 = vmatprep.subr.mxu0 0.0
    %303 = vmatpush1.msra.mxu0 %v274
    %304 = vmatprep.subr.mxu0 0.0
    %305 = vmatpush1.msra.mxu0 %v275
    %306 = vmatprep.subr.mxu0 0.0
    %307 = vmatpush1.msra.mxu0 %v276
    %308 = vmatprep.subr.mxu0 0.0
    %309 = vmatpush1.msra.mxu0 %v277
    %310 = vmatprep.subr.mxu0 0.0
    %311 = vmatpush1.msra.mxu0 %v278
    %312 = vmatprep.subr.mxu0 0.0
    %313 = vmatpush1.msra.mxu0 %v279
    %314 = vmatprep.subr.mxu0 0.0
    %315 = vmatpush1.msra.mxu0 %v280
    %316 = vmatprep.subr.mxu0 0.0
    %317 = vmatpush1.msra.mxu0 %v281
    %318 = vmatprep.subr.mxu0 0.0
    %319 = vmatpush1.msra.mxu0 %v282
    %320 = vmatprep.subr.mxu0 0.0
    %321 = vmatpush1.msra.mxu0 %v283
    %322 = vmatprep.subr.mxu0 0.0
    %323 = vmatpush1.msra.mxu0 %v284
    %324 = vmatprep.subr.mxu0 0.0
    %325 = vmatpush1.msra.mxu0 0.0
    %326 = vmatprep.subr.mxu0 0.0
    %327 = vmatpush1.msra.mxu0 0.0
    %328 = vmatprep.subr.mxu0 0.0
    %329 = vmatpush1.msra.mxu0 0.0
    %330 = vmatprep.subr.mxu0 0.0
    %331 = vmatpush1.msra.mxu0 0.0
    %332 = vmatprep.subr.mxu0 0.0
    %333 = vmatpush1.msra.mxu0 0.0
    %334 = vmatprep.subr.mxu0 0.0
    %335 = vmatpush1.msra.mxu0 0.0
    %336 = vmatprep.subr.mxu0 0.0
    %337 = vmatpush1.msra.mxu0 0.0
    %338 = vmatprep.subr.mxu0 0.0
    %339 = vmatpush1.msra.mxu0 0.0
    %340 = vmatprep.subr.mxu0 0.0
    %341 = vmatpush1.msra.mxu0 0.0
    %342 = vmatprep.subr.mxu0 0.0
    %343 = vmatpush1.msra.mxu0 0.0
    %344 = vmatprep.subr.mxu0 0.0
    %345 = vmatpush1.msra.mxu0 0.0
    %346 = vmatprep.subr.mxu0 0.0
    %347 = vmatpush1.msra.mxu0 0.0
    %348 = vmatprep.subr.mxu0 0.0
    %349 = vmatpush1.msra.mxu0 0.0
    %350 = vmatprep.subr.mxu0 0.0
    %351 = vmatpush1.msra.mxu0 0.0
    %352 = vmatprep.subr.mxu0 0.0
    %353 = vmatpush1.msra.mxu0 0.0
    %354 = vmatprep.subr.mxu0 0.0
    %355 = vmatpush1.msra.mxu0 0.0
    %356 = vmatprep.mubr.f32.mxu0 0.0
    %357 = vmatmul.mubr.f32.gmra.mrb[0].mxu0 %v268
    %v358 = vpop.f32.mrb[0].mxu0
    %v359 = vadd.f32 %v290, %v358
    %v360 = vpop.f32.mrb[0].mxu0
    %361 = vdwg.mxu0
    %v362 = vmax.f32 %v359, 0.0
    %v363 = vand.u32 2147483647, %v359
    %v364 = vsub.f32 0.0, %v363
    %v365 = vmul.f32 %v364, 1.442695
    %v366 = vpow.pop %v365
    %v367 = vadd.f32 %v366, 1.0
    %v368 = vlog2.pop %v367
    %v369 = vmul.f32 %v368, 0.6931472
    %v370 = vmul.f32 -0.5, %v366
    %v371 = vadd.f32 %v370, 1.0
    %v372 = vmul.f32 %v371, %v366
    %v373 = vand.u32 2147483647, %v366
    %vm374 = vcmp.lt.f32.partialorder %v373, 0.0004427343
    %v375 = vsel %vm374, %v372, %v369
    %v376 = vadd.f32 %v362, %v375
    %377 = vst [vmem:[#allocation8] sm:$0xff] %v376
    // Predicated region
    $region42: #{decoder_forward.1} parent=1 // pred_check
      _
    $region43: #{decoder_forward.1} parent=1 // pred_check_branch
      %379 = sbr.rel (0) target = $region45
    $region44: #{decoder_forward.1} parent=1 // pred_region
      %s381 = ssub.s32 128, 128
      %382 = vsyncadd [#allocation4], %s381
      %s384 = sshll.u32 [#allocation8], 4
      %s385 = int_to_ptr.vmem [resolvable:$true] %s384
      %387 = dma.vmem_to_hbm [thread:$0]  %s385, 128, %s7, [#allocation4]
    $region45: #{decoder_forward.1} parent=1 // pred_fallthru
      _
    // Predicated region
    $region46: #{decoder_forward.1} parent=1 // pred_check
      _
    $region47: #{decoder_forward.1} parent=1 // pred_check_branch
      %389 = sbr.rel (0) target = $region49
    $region48: #{decoder_forward.1} parent=1 // pred_region
      %390 = dma.done [#allocation4], 128
    $region49: #{decoder_forward.1} parent=1 // pred_fallthru
      _
    %391 = vsyncpa [#allocation3], 1
    %392 = vsyncpa [#allocation6], 1
    %393 = vsyncpa [#allocation4], 1

</llo_original>
